<compile_context>
chip_gen: v7x
topology: tpu7x:2x2x1
jax: 0.10.0
libtpu: 0.0.40
codegen_flags: <defaults>
</compile_context>

<pallas_src>
import jax
import jax.numpy as jnp
from jax.experimental import pallas as pl
from jax.experimental.pallas import tpu as pltpu


def critic_kernel(x_ref, w1_ref, b1_ref, w2_ref, b2_ref, w3r_ref, b3_ref, o_ref):
    # fc1: bf16 MXU matmul, f32 accumulate, f32 bias add + ReLU on the VPU.
    x = x_ref[...].astype(jnp.bfloat16)
    h1 = jnp.dot(x, w1_ref[...], preferred_element_type=jnp.float32) + b1_ref[...]
    h1 = jnp.maximum(h1, 0.0)

    # fc2: bf16 MXU matmul, f32 accumulate, f32 bias add + ReLU.
    h2 = jnp.dot(h1.astype(jnp.bfloat16), w2_ref[...],
                 preferred_element_type=jnp.float32) + b2_ref[...]
    h2 = jnp.maximum(h2, 0.0)

    # fc_out (out_features = 1): lane-dense VPU multiply + cross-lane reduce
    # (XLU slot), avoiding a near-empty MXU matvec.
    out = jnp.sum(h2 * w3r_ref[...], axis=-1, keepdims=True) + b3_ref[...]
    o_ref[...] = out.astype(o_ref.dtype)


def _pick_batch_tile(B, block_b):
    """MXU-aligned batch tile; guarantees >=2 grid steps once B >= 16."""
    if B < 16:
        return B                              # single full-batch tile
    target = min(block_b, pl.cdiv(B, 2))      # cap at ceil(B/2) -> >=2 steps (v7x megacore)
    if target >= 256:                         # v6e/v7x MXU is 256 rows tall
        return (target // 256) * 256
    if target >= 128:                         # v5e MXU is 128 rows tall
        return (target // 128) * 128
    return max(8, (target // 8) * 8)          # sublane multiple


def critic_forward(x, params, *, block_b=512):
    """x: [B, input_dim] (float32 or bfloat16). params: dict from init_params."""
    w1, b1 = params["w1"], params["b1"]
    w2, b2 = params["w2"], params["b2"]
    w3r, b3 = params["w3_row"], params["b3"]

    B, in_dim = x.shape
    hidden = w1.shape[1]

    tb = _pick_batch_tile(B, block_b)
    grid = (pl.cdiv(B, tb),)

    # Weights / biases: same block every grid step -> DMA'd once, VMEM-resident.
    def resident(a):
        return pl.BlockSpec(a.shape, lambda i: (0,) * a.ndim)

    bytes_accessed = (
        x.size * x.dtype.itemsize
        + sum(int(a.size) * a.dtype.itemsize for a in (w1, b1, w2, b2, w3r, b3))
        + B * 4  # output
    )
    cost = pl.CostEstimate(
        flops=2 * B * (in_dim * hidden + hidden * hidden + hidden),
        transcendentals=0,
        bytes_accessed=bytes_accessed,
    )

    compiler_kwargs = dict(dimension_semantics=("parallel",))  # megacore sharding on v7x
    if tb > 1024:
        # Only needed if a caller pushes tiles past ~1024 rows (v5e's default
        # scoped VMEM is 16 MiB); a no-op at the default block_b.
        compiler_kwargs["vmem_limit_bytes"] = 64 * 1024 * 1024

    return pl.pallas_call(
        critic_kernel,
        out_shape=jax.ShapeDtypeStruct((B, 1), jnp.float32),
        grid=grid,
        in_specs=[
            pl.BlockSpec((tb, in_dim), lambda i: (i, 0)),  # x: streamed per batch tile
            resident(w1), resident(b1),
            resident(w2), resident(b2),
            resident(w3r), resident(b3),
        ],
        out_specs=pl.BlockSpec((tb, 1), lambda i: (i, 0)),
        compiler_params=pltpu.CompilerParams(**compiler_kwargs),
        cost_estimate=cost,
    )(x, w1, b1, w2, b2, w3r, b3)


def init_params(key, input_dim=35, hidden=256):
    """Mimics PyTorch nn.Linear default init (uniform +-1/sqrt(fan_in)).

    w1/w2 are stored [in, out] in bfloat16 (MXU inputs); biases and the final
    projection row stay float32 (accumulation / VPU path).
    """
    ks = jax.random.split(key, 6)

    def linear(kw, kb, fan_in, fan_out):
        bound = 1.0 / jnp.sqrt(fan_in)
        w = jax.random.uniform(kw, (fan_in, fan_out), jnp.float32, -bound, bound)
        b = jax.random.uniform(kb, (1, fan_out), jnp.float32, -bound, bound)
        return w, b

    w1, b1 = linear(ks[0], ks[1], input_dim, hidden)
    w2, b2 = linear(ks[2], ks[3], hidden, hidden)
    w3, b3 = linear(ks[4], ks[5], hidden, 1)

    return {
        "w1": w1.astype(jnp.bfloat16), "b1": b1,
        "w2": w2.astype(jnp.bfloat16), "b2": b2,
        "w3_row": w3.T,                "b3": b3,   # (1, hidden) f32 row
    }


def critic_ref(x, p):
    """JAX reference with the same bf16-input / f32-accumulate numerics."""
    h1 = jnp.maximum(
        jnp.dot(x.astype(jnp.bfloat16), p["w1"],
                preferred_element_type=jnp.float32) + p["b1"], 0.0)
    h2 = jnp.maximum(
        jnp.dot(h1.astype(jnp.bfloat16), p["w2"],
                preferred_element_type=jnp.float32) + p["b2"], 0.0)
    return jnp.sum(h2 * p["w3_row"], axis=-1, keepdims=True) + p["b3"]


if __name__ == "__main__":
    key = jax.random.PRNGKey(0)
    k_x, k_x2, k_p = jax.random.split(key, 3)

    INPUT_DIM, HIDDEN = 35, 256
    params = init_params(k_p, input_dim=INPUT_DIM, hidden=HIDDEN)

    # Small batch: single full-batch tile (grid of 1).
    B1 = 8
    x1 = jax.random.normal(k_x, (B1, INPUT_DIM), jnp.float32)
    out1 = jax.block_until_ready(critic_forward(x1, params))
    ref1 = critic_ref(x1, params)
    assert out1.shape == (B1, 1), out1.shape
    assert jnp.allclose(out1, ref1, atol=1e-2, rtol=1e-2), "mismatch vs JAX reference (B=8)"

    # Medium batch: exercises the multi-step grid (>=2 tiles, partial last tile).
    B2 = 40
    x2 = jax.random.normal(k_x2, (B2, INPUT_DIM), jnp.float32)
    out2 = jax.block_until_ready(critic_forward(x2, params))
    ref2 = critic_ref(x2, params)
    assert out2.shape == (B2, 1), out2.shape
    assert jnp.allclose(out2, ref2, atol=1e-2, rtol=1e-2), "mismatch vs JAX reference (B=40)"

    print("KERNEL_OK")
</pallas_src>

<mosaic_0001>
module attributes {stable_mosaic.version = 11 : i64} {
  func.func @critic_kernel(%arg0: i32, %arg1: memref<8x35xf32, #tpu.memory_space<vmem>>, %arg2: memref<35x256xbf16, #tpu.memory_space<vmem>>, %arg3: memref<1x256xf32, #tpu.memory_space<vmem>>, %arg4: memref<256x256xbf16, #tpu.memory_space<vmem>>, %arg5: memref<1x256xf32, #tpu.memory_space<vmem>>, %arg6: memref<1x256xf32, #tpu.memory_space<vmem>>, %arg7: memref<1x1xf32, #tpu.memory_space<vmem>>, %arg8: memref<8x1xf32, #tpu.memory_space<vmem>>) attributes {dimension_semantics = [#tpu.dimension_semantics<parallel>], iteration_bounds = array<i64: 1>, scalar_prefetch = 0 : i64, scratch_operands = 0 : i64, tpu.core_type = #tpu.core_type<tc>, window_params = [{transform_indices = @transform_0, window_bounds = array<i64: 8, 35>}, {pipeline_mode = #tpu.pipeline_mode<synchronous>, transform_indices = @transform_1, window_bounds = array<i64: 35, 256>}, {pipeline_mode = #tpu.pipeline_mode<synchronous>, transform_indices = @transform_2, window_bounds = array<i64: 1, 256>}, {pipeline_mode = #tpu.pipeline_mode<synchronous>, transform_indices = @transform_3, window_bounds = array<i64: 256, 256>}, {pipeline_mode = #tpu.pipeline_mode<synchronous>, transform_indices = @transform_4, window_bounds = array<i64: 1, 256>}, {pipeline_mode = #tpu.pipeline_mode<synchronous>, transform_indices = @transform_5, window_bounds = array<i64: 1, 256>}, {pipeline_mode = #tpu.pipeline_mode<synchronous>, transform_indices = @transform_6, window_bounds = array<i64: 1, 1>}, {transform_indices = @transform_7, window_bounds = array<i64: 8, 1>}]} {
    %c0 = arith.constant 0 : index
    %c0_0 = arith.constant 0 : index
    %0 = vector.load %arg1[%c0, %c0_0] : memref<8x35xf32, #tpu.memory_space<vmem>>, vector<8x35xf32>
    %1 = arith.truncf %0 : vector<8x35xf32> to vector<8x35xbf16>
    %c0_1 = arith.constant 0 : index
    %c0_2 = arith.constant 0 : index
    %2 = vector.load %arg2[%c0_1, %c0_2] : memref<35x256xbf16, #tpu.memory_space<vmem>>, vector<35x256xbf16>
    %cst = arith.constant dense<0.000000e+00> : vector<8x256xf32>
    %3 = tpu.matmul %1, %2, %cst {dimension_numbers = #tpu.dot_dimension_numbers<[1], [0], [0], [1], [0, 0, 1, 1], [], []>} : vector<8x35xbf16>, vector<35x256xbf16>, vector<8x256xf32> -> vector<8x256xf32>
    %c0_3 = arith.constant 0 : index
    %c0_4 = arith.constant 0 : index
    %4 = vector.load %arg3[%c0_3, %c0_4] : memref<1x256xf32, #tpu.memory_space<vmem>>, vector<1x256xf32>
    %5 = vector.broadcast %4 : vector<1x256xf32> to vector<8x256xf32>
    %6 = arith.addf %3, %5 : vector<8x256xf32>
    %cst_5 = arith.constant 0.000000e+00 : f32
    %7 = vector.broadcast %cst_5 : f32 to vector<8x256xf32>
    %8 = arith.maximumf %6, %7 : vector<8x256xf32>
    %9 = arith.truncf %8 : vector<8x256xf32> to vector<8x256xbf16>
    %c0_6 = arith.constant 0 : index
    %c0_7 = arith.constant 0 : index
    %10 = vector.load %arg4[%c0_6, %c0_7] : memref<256x256xbf16, #tpu.memory_space<vmem>>, vector<256x256xbf16>
    %cst_8 = arith.constant dense<0.000000e+00> : vector<8x256xf32>
    %11 = tpu.matmul %9, %10, %cst_8 {dimension_numbers = #tpu.dot_dimension_numbers<[1], [0], [0], [1], [0, 0, 1, 1], [], []>} : vector<8x256xbf16>, vector<256x256xbf16>, vector<8x256xf32> -> vector<8x256xf32>
    %c0_9 = arith.constant 0 : index
    %c0_10 = arith.constant 0 : index
    %12 = vector.load %arg5[%c0_9, %c0_10] : memref<1x256xf32, #tpu.memory_space<vmem>>, vector<1x256xf32>
    %13 = vector.broadcast %12 : vector<1x256xf32> to vector<8x256xf32>
    %14 = arith.addf %11, %13 : vector<8x256xf32>
    %cst_11 = arith.constant 0.000000e+00 : f32
    %15 = vector.broadcast %cst_11 : f32 to vector<8x256xf32>
    %16 = arith.maximumf %14, %15 : vector<8x256xf32>
    %c0_12 = arith.constant 0 : index
    %c0_13 = arith.constant 0 : index
    %17 = vector.load %arg6[%c0_12, %c0_13] : memref<1x256xf32, #tpu.memory_space<vmem>>, vector<1x256xf32>
    %18 = vector.broadcast %17 : vector<1x256xf32> to vector<8x256xf32>
    %19 = arith.mulf %16, %18 : vector<8x256xf32>
    %cst_14 = arith.constant dense<0.000000e+00> : vector<8xf32>
    %20 = vector.multi_reduction <add>, %19, %cst_14 [1] : vector<8x256xf32> to vector<8xf32>
    %21 = vector.shape_cast %20 : vector<8xf32> to vector<8x1xf32>
    %c0_15 = arith.constant 0 : index
    %c0_16 = arith.constant 0 : index
    %22 = vector.load %arg7[%c0_15, %c0_16] : memref<1x1xf32, #tpu.memory_space<vmem>>, vector<1x1xf32>
    %23 = vector.broadcast %22 : vector<1x1xf32> to vector<8x1xf32>
    %24 = arith.addf %21, %23 : vector<8x1xf32>
    %c0_17 = arith.constant 0 : index
    %c0_18 = arith.constant 0 : index
    %25 = vector.load %arg8[%c0_17, %c0_18] : memref<8x1xf32, #tpu.memory_space<vmem>>, vector<8x1xf32>
    tpu.vector_store %arg8[%c0_17, %c0_18], %24 {strides = array<i32>} : memref<8x1xf32, #tpu.memory_space<vmem>>, vector<8x1xf32>,
    return
  }
  func.func @transform_0(%arg0: i32) -> (i32, i32) {
    %c0_i32 = arith.constant 0 : i32
    %c0_i32_0 = arith.constant 0 : i32
    return %arg0, %c0_i32 : i32, i32
  }
  func.func @transform_1(%arg0: i32) -> (i32, i32) {
    %c0_i32 = arith.constant 0 : i32
    %c0_i32_0 = arith.constant 0 : i32
    %c0_i32_1 = arith.constant 0 : i32
    return %c0_i32, %c0_i32_0 : i32, i32
  }
  func.func @transform_2(%arg0: i32) -> (i32, i32) {
    %c0_i32 = arith.constant 0 : i32
    %c0_i32_0 = arith.constant 0 : i32
    %c0_i32_1 = arith.constant 0 : i32
    return %c0_i32, %c0_i32_0 : i32, i32
  }
  func.func @transform_3(%arg0: i32) -> (i32, i32) {
    %c0_i32 = arith.constant 0 : i32
    %c0_i32_0 = arith.constant 0 : i32
    %c0_i32_1 = arith.constant 0 : i32
    return %c0_i32, %c0_i32_0 : i32, i32
  }
  func.func @transform_4(%arg0: i32) -> (i32, i32) {
    %c0_i32 = arith.constant 0 : i32
    %c0_i32_0 = arith.constant 0 : i32
    %c0_i32_1 = arith.constant 0 : i32
    return %c0_i32, %c0_i32_0 : i32, i32
  }
  func.func @transform_5(%arg0: i32) -> (i32, i32) {
    %c0_i32 = arith.constant 0 : i32
    %c0_i32_0 = arith.constant 0 : i32
    %c0_i32_1 = arith.constant 0 : i32
    return %c0_i32, %c0_i32_0 : i32, i32
  }
  func.func @transform_6(%arg0: i32) -> (i32, i32) {
    %c0_i32 = arith.constant 0 : i32
    %c0_i32_0 = arith.constant 0 : i32
    %c0_i32_1 = arith.constant 0 : i32
    return %c0_i32, %c0_i32_0 : i32, i32
  }
  func.func @transform_7(%arg0: i32) -> (i32, i32) {
    %c0_i32 = arith.constant 0 : i32
    %c0_i32_0 = arith.constant 0 : i32
    return %arg0, %c0_i32 : i32, i32
  }
}

</mosaic_0001>

<llo_original>
// kernel: tpu_custom_call.1
$region0: #{tpu_custom_call.1}
  #allocation0 [shape = 'u32[]', space=smem, size = 0x4, offset = 0x4, fixed_abs, tag = 'smem constant byte address 0x4 - core index']
  #allocation1 [shape = 'u32[144,128]{1,0:T(1,128)}', space=vmem, size = 0x12000, scoped, tag = 'internal scratch']
  #allocation2 [shape = 'f32[1,1]{1,0:T(1,128)S(1)}', space=vmem, size = 0x200, scoped, tag = 'scoped memory for tpu_custom_call.1']
  %s0 = inlined_call_operand.hbm [shape: f32[8,35], index: 0, kind: input, shape index: {}]
  %s1 = inlined_call_operand.hbm [shape: bf16[35,256], index: 1, kind: input, shape index: {}]
  %s2 = inlined_call_operand.vmem [shape: f32[1,256], index: 2, kind: input, shape index: {}]
  %s3 = inlined_call_operand.hbm [shape: bf16[256,256], index: 3, kind: input, shape index: {}]
  %s4 = inlined_call_operand.vmem [shape: f32[1,256], index: 4, kind: input, shape index: {}]
  %s5 = inlined_call_operand.vmem [shape: f32[1,256], index: 5, kind: input, shape index: {}]
  %s6 = inlined_call_operand.<no memory space> [shape: f32[1,1], index: 6, kind: input, shape index: {}]
  %s7 = inlined_call_operand.vmem [shape: f32[8,1], index: 7, kind: output, shape index: {}]
  %s8 = sld [smem:[#allocation0]]
  $region50: #{tpu_custom_call.1} parent=0
    _
  %s10 = ssub.s32 1, %s8
  %s11 = scalar_select 0, %s10, %s8
  %v12 = vstv %s6
  %13 = vst [vmem:[#allocation2] sm:$0x1] %v12
  $region1: #{tpu_custom_call.1} parent=0
    #allocation3 [shape = 'u8[4096]{0}', space=vmem, size = 0x1000, scoped, tag = 'input window, operand 0, single buffered']
    #allocation4 [shape = 's32[1]{0}', space=sflag, size = 0x4, scoped, tag = 'scoped memory for tpu_custom_call.1']
    #allocation5 [shape = 'u8[20480]{0}', space=vmem, size = 0x5000, scoped, tag = 'input window, operand 1, single buffered']
    #allocation6 [shape = 's32[1]{0}', space=sflag, size = 0x4, scoped, tag = 'scoped memory for tpu_custom_call.1']
    #allocation7 [shape = 'u8[131072]{0}', space=vmem, size = 0x20000, scoped, tag = 'input window, operand 3, single buffered']
    %14 = vsyncpa [#allocation4], 0
    %15 = vsyncpa [#allocation6], 0
    // Predicated region
    $region2: #{tpu_custom_call.1} parent=1 // pred_check
      _
    $region3: #{tpu_custom_call.1} parent=1 // pred_check_branch
      %17 = sbr.rel (0) target = $region5
    $region4: #{tpu_custom_call.1} parent=1 // pred_region
      %s19 = ssub.s32 128, 128
      %20 = vsyncadd [#allocation4], %s19
      %s22 = sshll.u32 [#allocation3], 4
      %s23 = int_to_ptr.vmem [resolvable:$true] %s22
      %25 = dma.hbm_to_vmem [thread:$0]  %s0, 128, %s23, [#allocation4]
    $region5: #{tpu_custom_call.1} parent=1 // pred_fallthru
      _
    // Predicated region
    $region6: #{tpu_custom_call.1} parent=1 // pred_check
      _
    $region7: #{tpu_custom_call.1} parent=1 // pred_check_branch
      %27 = sbr.rel (0) target = $region9
    $region8: #{tpu_custom_call.1} parent=1 // pred_region
      %s29 = ssub.s32 640, 640
      %30 = vsyncadd [#allocation6], %s29
      %s31 = sshll.u32 [#allocation5], 4
      %s32 = int_to_ptr.vmem [resolvable:$true] %s31
      %37 = dma.hbm_to_vmem [thread:$0]  %s1, 640, %s32, [#allocation6], 128, 128, 8
    $region9: #{tpu_custom_call.1} parent=1 // pred_fallthru
      _
    // Predicated region
    $region10: #{tpu_custom_call.1} parent=1 // pred_check
      _
    $region11: #{tpu_custom_call.1} parent=1 // pred_check_branch
      %39 = sbr.rel (0) target = $region13
    $region12: #{tpu_custom_call.1} parent=1 // pred_region
      _
    $region13: #{tpu_custom_call.1} parent=1 // pred_fallthru
      _
    // Predicated region
    $region14: #{tpu_custom_call.1} parent=1 // pred_check
      _
    $region15: #{tpu_custom_call.1} parent=1 // pred_check_branch
      %41 = sbr.rel (0) target = $region17
    $region16: #{tpu_custom_call.1} parent=1 // pred_region
      %s43 = ssub.s32 4096, 4096
      %44 = vsyncadd [#allocation6], %s43
      %s45 = sshll.u32 [#allocation7], 4
      %s46 = int_to_ptr.vmem [resolvable:$true] %s45
      %51 = dma.hbm_to_vmem [thread:$0]  %s3, 4096, %s46, [#allocation6], 128, 128, 8
    $region17: #{tpu_custom_call.1} parent=1 // pred_fallthru
      _
    // Predicated region
    $region18: #{tpu_custom_call.1} parent=1 // pred_check
      _
    $region19: #{tpu_custom_call.1} parent=1 // pred_check_branch
      %53 = sbr.rel (0) target = $region21
    $region20: #{tpu_custom_call.1} parent=1 // pred_region
      _
    $region21: #{tpu_custom_call.1} parent=1 // pred_fallthru
      _
    // Predicated region
    $region22: #{tpu_custom_call.1} parent=1 // pred_check
      _
    $region23: #{tpu_custom_call.1} parent=1 // pred_check_branch
      %55 = sbr.rel (0) target = $region25
    $region24: #{tpu_custom_call.1} parent=1 // pred_region
      _
    $region25: #{tpu_custom_call.1} parent=1 // pred_fallthru
      _
    // Predicated region
    $region26: #{tpu_custom_call.1} parent=1 // pred_check
      _
    $region27: #{tpu_custom_call.1} parent=1 // pred_check_branch
      %57 = sbr.rel (0) target = $region29
    $region28: #{tpu_custom_call.1} parent=1 // pred_region
      _
    $region29: #{tpu_custom_call.1} parent=1 // pred_fallthru
      _
    // Predicated region
    $region30: #{tpu_custom_call.1} parent=1 // pred_check
      _
    $region31: #{tpu_custom_call.1} parent=1 // pred_check_branch
      %59 = sbr.rel (0) target = $region33
    $region32: #{tpu_custom_call.1} parent=1 // pred_region
      %60 = dma.done [#allocation4], 128
    $region33: #{tpu_custom_call.1} parent=1 // pred_fallthru
      _
    // Predicated region
    $region34: #{tpu_custom_call.1} parent=1 // pred_check
      _
    $region35: #{tpu_custom_call.1} parent=1 // pred_check_branch
      %62 = sbr.rel (0) target = $region37
    $region36: #{tpu_custom_call.1} parent=1 // pred_region
      %63 = dma.done [#allocation6], 640
    $region37: #{tpu_custom_call.1} parent=1 // pred_fallthru
      _
    // Predicated region
    $region38: #{tpu_custom_call.1} parent=1 // pred_check
      _
    $region39: #{tpu_custom_call.1} parent=1 // pred_check_branch
      %65 = sbr.rel (0) target = $region41
    $region40: #{tpu_custom_call.1} parent=1 // pred_region
      %66 = dma.done [#allocation6], 4096
    $region41: #{tpu_custom_call.1} parent=1 // pred_fallthru
      _
    %v68 = vld [vmem:[#allocation3] sm:$0xff]
    %v69 = vpack.c.bf16 %v68, %v68
    %v70 = vld [vmem:[#allocation5] sm:$0xff]
    %v71 = vld [vmem:[#allocation5 + $0x8] sm:$0xff]
    %v72 = vld [vmem:[#allocation5 + $0x10] sm:$0xff]
    %v73 = vld [vmem:[#allocation5 + $0x18] sm:$0xff]
    %v74 = vld [vmem:[#allocation5 + $0x20] sm:$0x33]
    %v75 = vld [vmem:[%s2] sm:$0x3]
    %v77 = vlaneseq
    %v78 = vshrl.u32 %v77, 7
    %v79 = vsub.s32 0, %v78
    %v80 = vrot.slane %v75, %v79
    %v81 = vlaneseq
    %v82 = vshrl.u32 %v81, 7
    %v83 = vsub.s32 1, %v82
    %v84 = vrot.slane %v75, %v83
    %v92 = vunpack.c.l.b16 %v70
    %v93 = vunpack.c.h.b16 %v70
    %v94 = vunpack.c.l.b16 %v71
    %v95 = vunpack.c.h.b16 %v71
    %v96 = vunpack.c.l.b16 %v72
    %v97 = vunpack.c.h.b16 %v72
    %v98 = vunpack.c.l.b16 %v73
    %v99 = vunpack.c.h.b16 %v73
    %v100 = vunpack.c.l.b16 %v74
    %v101 = vunpack.c.h.b16 %v74
    %v102 = vpack.c.b16 %v94, %v92
    %v103 = vpack.c.b16 %v95, %v93
    %v104 = vpack.c.b16 %v98, %v96
    %v105 = vpack.c.b16 %v99, %v97
    %v106 = vpack.c.b16 %v100, %v100
    %v107 = vpack.c.b16 %v101, %v101
    %vm112 = vcmask 285696
    %v114 = vsel %vm112, %v69, 0
    %vm116 = vcmask 1040384
    %vm117 = vcmask 1041408
    %v118 = vsel %vm116, 4294967295, 65535
    %v119 = vsel %vm117, %v118, 0
    %v121 = vand.u32 %v106, %v119
    %v124 = vand.u32 %v107, %v119
    %126 = vmatprep.subr.bf16.mxu0 %v103
    %127 = vmatpush1.bf16.msra.mxu0 %v102
    %128 = vmatprep.subr.bf16.mxu0 %v105
    %129 = vmatpush1.bf16.msra.mxu0 %v104
    %130 = vmatprep.subr.bf16.mxu0 %v124
    %131 = vmatpush1.bf16.msra.mxu0 %v121
    %132 = vmatprep.subr.bf16.mxu0 0
    %133 = vmatpush1.bf16.msra.mxu0 0
    %134 = vmatprep.subr.bf16.mxu0 0
    %135 = vmatpush1.bf16.msra.mxu0 0
    %136 = vmatprep.subr.bf16.mxu0 0
    %137 = vmatpush1.bf16.msra.mxu0 0
    %138 = vmatprep.subr.bf16.mxu0 0
    %139 = vmatpush1.bf16.msra.mxu0 0
    %140 = vmatprep.subr.bf16.mxu0 0
    %141 = vmatpush1.bf16.msra.mxu0 0
    %142 = vmatprep.subr.bf16.mxu0 0
    %143 = vmatpush1.bf16.msra.mxu0 0
    %144 = vmatprep.subr.bf16.mxu0 0
    %145 = vmatpush1.bf16.msra.mxu0 0
    %146 = vmatprep.subr.bf16.mxu0 0
    %147 = vmatpush1.bf16.msra.mxu0 0
    %148 = vmatprep.subr.bf16.mxu0 0
    %149 = vmatpush1.bf16.msra.mxu0 0
    %150 = vmatprep.subr.bf16.mxu0 0
    %151 = vmatpush1.bf16.msra.mxu0 0
    %152 = vmatprep.subr.bf16.mxu0 0
    %153 = vmatpush1.bf16.msra.mxu0 0
    %154 = vmatprep.subr.bf16.mxu0 0
    %155 = vmatpush1.bf16.msra.mxu0 0
    %156 = vmatprep.subr.bf16.mxu0 0
    %157 = vmatpush1.bf16.msra.mxu0 0
    %158 = vmatprep.mubr.bf16.mxu0 0
    %159 = vmatmul.mubr.bf16.gmra.mrb[0].mxu0 %v114
    %v160 = vpop.f32.mrb[0].mxu0
    %v161 = vadd.f32 %v80, %v160
    %v162 = vpop.f32.mrb[0].mxu0
    %v163 = vadd.f32 %v84, %v162
    %v164 = vpop.f32.mrb[0].mxu0
    %v165 = vpop.f32.mrb[0].mxu0
    %166 = vdwg.mxu0
    %v167 = vmax.f32 %v161, 0.0
    %v168 = vmax.f32 %v163, 0.0
    %v169 = vpack.c.bf16 %v167, %v167
    %v170 = vpack.c.bf16 %v168, %v168
    %v171 = vld [vmem:[#allocation7] sm:$0xff]
    %v172 = vld [vmem:[#allocation7 + $0x8] sm:$0xff]
    %v173 = vld [vmem:[#allocation7 + $0x10] sm:$0xff]
    %v174 = vld [vmem:[#allocation7 + $0x18] sm:$0xff]
    %v175 = vld [vmem:[#allocation7 + $0x20] sm:$0xff]
    %v176 = vld [vmem:[#allocation7 + $0x28] sm:$0xff]
    %v177 = vld [vmem:[#allocation7 + $0x30] sm:$0xff]
    %v178 = vld [vmem:[#allocation7 + $0x38] sm:$0xff]
    %v179 = vld [vmem:[#allocation7 + $0x40] sm:$0xff]
    %v180 = vld [vmem:[#allocation7 + $0x48] sm:$0xff]
    %v181 = vld [vmem:[#allocation7 + $0x50] sm:$0xff]
    %v182 = vld [vmem:[#allocation7 + $0x58] sm:$0xff]
    %v183 = vld [vmem:[#allocation7 + $0x60] sm:$0xff]
    %v184 = vld [vmem:[#allocation7 + $0x68] sm:$0xff]
    %v185 = vld [vmem:[#allocation7 + $0x70] sm:$0xff]
    %v186 = vld [vmem:[#allocation7 + $0x78] sm:$0xff]
    %v187 = vld [vmem:[#allocation7 + $0x80] sm:$0xff]
    %v188 = vld [vmem:[#allocation7 + $0x88] sm:$0xff]
    %v189 = vld [vmem:[#allocation7 + $0x90] sm:$0xff]
    %v190 = vld [vmem:[#allocation7 + $0x98] sm:$0xff]
    %v191 = vld [vmem:[#allocation7 + $0xa0] sm:$0xff]
    %v192 = vld [vmem:[#allocation7 + $0xa8] sm:$0xff]
    %v193 = vld [vmem:[#allocation7 + $0xb0] sm:$0xff]
    %v194 = vld [vmem:[#allocation7 + $0xb8] sm:$0xff]
    %v195 = vld [vmem:[#allocation7 + $0xc0] sm:$0xff]
    %v196 = vld [vmem:[#allocation7 + $0xc8] sm:$0xff]
    %v197 = vld [vmem:[#allocation7 + $0xd0] sm:$0xff]
    %v198 = vld [vmem:[#allocation7 + $0xd8] sm:$0xff]
    %v199 = vld [vmem:[#allocation7 + $0xe0] sm:$0xff]
    %v200 = vld [vmem:[#allocation7 + $0xe8] sm:$0xff]
    %v201 = vld [vmem:[#allocation7 + $0xf0] sm:$0xff]
    %v202 = vld [vmem:[#allocation7 + $0xf8] sm:$0xff]
    %v203 = vld [vmem:[%s4] sm:$0x3]
    %v205 = vlaneseq
    %v206 = vshrl.u32 %v205, 7
    %v207 = vsub.s32 0, %v206
    %v208 = vrot.slane %v203, %v207
    %v209 = vlaneseq
    %v210 = vshrl.u32 %v209, 7
    %v211 = vsub.s32 1, %v210
    %v212 = vrot.slane %v203, %v211
    %v247 = vunpack.c.l.b16 %v171
    %v248 = vunpack.c.h.b16 %v171
    %v249 = vunpack.c.l.b16 %v172
    %v250 = vunpack.c.h.b16 %v172
    %v251 = vunpack.c.l.b16 %v173
    %v252 = vunpack.c.h.b16 %v173
    %v253 = vunpack.c.l.b16 %v174
    %v254 = vunpack.c.h.b16 %v174
    %v255 = vunpack.c.l.b16 %v175
    %v256 = vunpack.c.h.b16 %v175
    %v257 = vunpack.c.l.b16 %v176
    %v258 = vunpack.c.h.b16 %v176
    %v259 = vunpack.c.l.b16 %v177
    %v260 = vunpack.c.h.b16 %v177
    %v261 = vunpack.c.l.b16 %v178
    %v262 = vunpack.c.h.b16 %v178
    %v263 = vunpack.c.l.b16 %v179
    %v264 = vunpack.c.h.b16 %v179
    %v265 = vunpack.c.l.b16 %v180
    %v266 = vunpack.c.h.b16 %v180
    %v267 = vunpack.c.l.b16 %v181
    %v268 = vunpack.c.h.b16 %v181
    %v269 = vunpack.c.l.b16 %v182
    %v270 = vunpack.c.h.b16 %v182
    %v271 = vunpack.c.l.b16 %v183
    %v272 = vunpack.c.h.b16 %v183
    %v273 = vunpack.c.l.b16 %v184
    %v274 = vunpack.c.h.b16 %v184
    %v275 = vunpack.c.l.b16 %v185
    %v276 = vunpack.c.h.b16 %v185
    %v277 = vunpack.c.l.b16 %v186
    %v278 = vunpack.c.h.b16 %v186
    %v279 = vunpack.c.l.b16 %v187
    %v280 = vunpack.c.h.b16 %v187
    %v281 = vunpack.c.l.b16 %v188
    %v282 = vunpack.c.h.b16 %v188
    %v283 = vunpack.c.l.b16 %v189
    %v284 = vunpack.c.h.b16 %v189
    %v285 = vunpack.c.l.b16 %v190
    %v286 = vunpack.c.h.b16 %v190
    %v287 = vunpack.c.l.b16 %v191
    %v288 = vunpack.c.h.b16 %v191
    %v289 = vunpack.c.l.b16 %v192
    %v290 = vunpack.c.h.b16 %v192
    %v291 = vunpack.c.l.b16 %v193
    %v292 = vunpack.c.h.b16 %v193
    %v293 = vunpack.c.l.b16 %v194
    %v294 = vunpack.c.h.b16 %v194
    %v295 = vunpack.c.l.b16 %v195
    %v296 = vunpack.c.h.b16 %v195
    %v297 = vunpack.c.l.b16 %v196
    %v298 = vunpack.c.h.b16 %v196
    %v299 = vunpack.c.l.b16 %v197
    %v300 = vunpack.c.h.b16 %v197
    %v301 = vunpack.c.l.b16 %v198
    %v302 = vunpack.c.h.b16 %v198
    %v303 = vunpack.c.l.b16 %v199
    %v304 = vunpack.c.h.b16 %v199
    %v305 = vunpack.c.l.b16 %v200
    %v306 = vunpack.c.h.b16 %v200
    %v307 = vunpack.c.l.b16 %v201
    %v308 = vunpack.c.h.b16 %v201
    %v309 = vunpack.c.l.b16 %v202
    %v310 = vunpack.c.h.b16 %v202
    %v311 = vpack.c.b16 %v249, %v247
    %v312 = vpack.c.b16 %v250, %v248
    %v313 = vpack.c.b16 %v253, %v251
    %v314 = vpack.c.b16 %v254, %v252
    %v315 = vpack.c.b16 %v257, %v255
    %v316 = vpack.c.b16 %v258, %v256
    %v317 = vpack.c.b16 %v261, %v259
    %v318 = vpack.c.b16 %v262, %v260
    %v319 = vpack.c.b16 %v265, %v263
    %v320 = vpack.c.b16 %v266, %v264
    %v321 = vpack.c.b16 %v269, %v267
    %v322 = vpack.c.b16 %v270, %v268
    %v323 = vpack.c.b16 %v273, %v271
    %v324 = vpack.c.b16 %v274, %v272
    %v325 = vpack.c.b16 %v277, %v275
    %v326 = vpack.c.b16 %v278, %v276
    %v327 = vpack.c.b16 %v281, %v279
    %v328 = vpack.c.b16 %v282, %v280
    %v329 = vpack.c.b16 %v285, %v283
    %v330 = vpack.c.b16 %v286, %v284
    %v331 = vpack.c.b16 %v289, %v287
    %v332 = vpack.c.b16 %v290, %v288
    %v333 = vpack.c.b16 %v293, %v291
    %v334 = vpack.c.b16 %v294, %v292
    %v335 = vpack.c.b16 %v297, %v295
    %v336 = vpack.c.b16 %v298, %v296
    %v337 = vpack.c.b16 %v301, %v299
    %v338 = vpack.c.b16 %v302, %v300
    %v339 = vpack.c.b16 %v305, %v303
    %v340 = vpack.c.b16 %v306, %v304
    %v341 = vpack.c.b16 %v309, %v307
    %v342 = vpack.c.b16 %v310, %v308
    %375 = vmatprep.subr.bf16.mxu0 %v312
    %376 = vmatpush1.bf16.msra.mxu0 %v311
    %377 = vmatprep.subr.bf16.mxu0 %v314
    %378 = vmatpush1.bf16.msra.mxu0 %v313
    %379 = vmatprep.subr.bf16.mxu0 %v316
    %380 = vmatpush1.bf16.msra.mxu0 %v315
    %381 = vmatprep.subr.bf16.mxu0 %v318
    %382 = vmatpush1.bf16.msra.mxu0 %v317
    %383 = vmatprep.subr.bf16.mxu0 %v320
    %384 = vmatpush1.bf16.msra.mxu0 %v319
    %385 = vmatprep.subr.bf16.mxu0 %v322
    %386 = vmatpush1.bf16.msra.mxu0 %v321
    %387 = vmatprep.subr.bf16.mxu0 %v324
    %388 = vmatpush1.bf16.msra.mxu0 %v323
    %389 = vmatprep.subr.bf16.mxu0 %v326
    %390 = vmatpush1.bf16.msra.mxu0 %v325
    %391 = vmatprep.subr.bf16.mxu0 %v328
    %392 = vmatpush1.bf16.msra.mxu0 %v327
    %393 = vmatprep.subr.bf16.mxu0 %v330
    %394 = vmatpush1.bf16.msra.mxu0 %v329
    %395 = vmatprep.subr.bf16.mxu0 %v332
    %396 = vmatpush1.bf16.msra.mxu0 %v331
    %397 = vmatprep.subr.bf16.mxu0 %v334
    %398 = vmatpush1.bf16.msra.mxu0 %v333
    %399 = vmatprep.subr.bf16.mxu0 %v336
    %400 = vmatpush1.bf16.msra.mxu0 %v335
    %401 = vmatprep.subr.bf16.mxu0 %v338
    %402 = vmatpush1.bf16.msra.mxu0 %v337
    %403 = vmatprep.subr.bf16.mxu0 %v340
    %404 = vmatpush1.bf16.msra.mxu0 %v339
    %405 = vmatprep.subr.bf16.mxu0 %v342
    %406 = vmatpush1.bf16.msra.mxu0 %v341
    %407 = vmatprep.mubr.bf16.mxu0 %v170
    %408 = vmatmul.mubr.bf16.gmra.mrb[0].mxu0 %v169
    %v409 = vpop.f32.mrb[0].mxu0
    %v410 = vadd.f32 %v208, %v409
    %v411 = vpop.f32.mrb[0].mxu0
    %v412 = vadd.f32 %v212, %v411
    %v413 = vpop.f32.mrb[0].mxu0
    %v414 = vpop.f32.mrb[0].mxu0
    %415 = vdwg.mxu0
    %v416 = vmax.f32 %v410, 0.0
    %v417 = vmax.f32 %v412, 0.0
    %v418 = vld [vmem:[%s5] sm:$0x3]
    %v420 = vlaneseq
    %v421 = vshrl.u32 %v420, 7
    %v422 = vsub.s32 0, %v421
    %v423 = vrot.slane %v418, %v422
    %v424 = vlaneseq
    %v425 = vshrl.u32 %v424, 7
    %v426 = vsub.s32 1, %v425
    %v427 = vrot.slane %v418, %v426
    %v430 = vmul.f32 %v416, %v423
    %v431 = vmul.f32 %v417, %v427
    %v432 = vadd.f32 %v430, %v431
    %433 = vadd.xlane.f32.xlu0 %v432
    %v434 = vpop.xlane.xlu0 %433
    %v435 = vld [vmem:[#allocation2] sm:$0x1]
    %v437 = vlaneseq
    %v438 = vshrl.u32 %v437, 7
    %v439 = vsub.s32 0, %v438
    %v440 = vrot.slane %v435, %v439
    %v442 = vadd.f32 %v434, %v440
    %vm443 = vcmask 7168
    %444 = vst.msk [vmem:[%s7] sm:$0xff] %vm443, %v442
    // Predicated region
    $region42: #{tpu_custom_call.1} parent=1 // pred_check
      _
    $region43: #{tpu_custom_call.1} parent=1 // pred_check_branch
      %446 = sbr.rel (0) target = $region45
    $region44: #{tpu_custom_call.1} parent=1 // pred_region
      _
    $region45: #{tpu_custom_call.1} parent=1 // pred_fallthru
      _
    // Predicated region
    $region46: #{tpu_custom_call.1} parent=1 // pred_check
      _
    $region47: #{tpu_custom_call.1} parent=1 // pred_check_branch
      %448 = sbr.rel (0) target = $region49
    $region48: #{tpu_custom_call.1} parent=1 // pred_region
      _
    $region49: #{tpu_custom_call.1} parent=1 // pred_fallthru
      _
    %449 = vsyncpa [#allocation4], 1
    %450 = vsyncpa [#allocation6], 1

</llo_original>
